<compile_context>
chip_gen: v7x
topology: tpu7x:2x2x1
jax: 0.10.0
libtpu: 0.0.40
codegen_flags: <defaults>
</compile_context>

<pallas_src>
import functools

import jax
import jax.numpy as jnp
from jax import lax
from jax.experimental import pallas as pl
from jax.experimental.pallas import tpu as pltpu

LANE = 128          # TPU lane width
SUBLANE_BF16 = 16   # bf16 sublane packing


def densenet_kernel(x_ref, w_in_ref, b_in_ref, w_h_ref, b_h_ref,
                    w_out_ref, b_out_ref, o_ref, *,
                    n_hidden_layers, softmax, n_output_real):
    # Input layer + ReLU.  The f32 activation tile is cast to bf16 in-kernel
    # (VPU work, hides under the matmul); matmuls run on the MXU in bf16 with
    # f32 accumulation, bias/ReLU/softmax stay f32.
    h = jnp.dot(x_ref[...].astype(jnp.bfloat16), w_in_ref[...],
                preferred_element_type=jnp.float32)
    h = jnp.maximum(h + b_in_ref[...], 0.0).astype(jnp.bfloat16)

    # Hidden layers + ReLU.  n_hidden_layers is small, so a static unrolled
    # Python loop is fine; bias+ReLU+cast is fused so only one bf16
    # intermediate stays live between layers.
    for l in range(n_hidden_layers):
        h = jnp.dot(h, w_h_ref[l], preferred_element_type=jnp.float32)
        h = jnp.maximum(h + b_h_ref[l], 0.0).astype(jnp.bfloat16)

    # Output layer (columns padded to a lane-dense multiple of 128 at prep
    # time, so the store below is full unmasked vregs).
    y = jnp.dot(h, w_out_ref[...], preferred_element_type=jnp.float32)
    y = y + b_out_ref[...]

    if softmax:
        if y.shape[-1] != n_output_real:
            # Mask padded logit lanes so they don't pollute the max / sum.
            col = lax.broadcasted_iota(jnp.int32, y.shape, 1)
            y = jnp.where(col < n_output_real, y, -jnp.inf)
        # Numerically stable softmax over the last axis; approx reciprocal
        # lowers to the EUP slot (otherwise idle in the epilogue).
        y = y - jnp.max(y, axis=-1, keepdims=True)
        e = jnp.exp(y)
        y = e * pl.reciprocal(jnp.sum(e, axis=-1, keepdims=True), approx=True)

    o_ref[...] = y.astype(o_ref.dtype)


def _round_up(n, m):
    return ((n + m - 1) // m) * m


def _pad_axis(a, axis, target):
    pad = target - a.shape[axis]
    if pad <= 0:
        return a
    widths = [(0, 0)] * a.ndim
    widths[axis] = (0, pad)
    return jnp.pad(a, widths)


def _pick_tile_b(B, requested=None):
    """Batch tile: multiple of 16 (bf16 sublanes).  When not requested, aim
    for >= 4 grid steps (pipeline overlap + megacore balance) while keeping
    the MXU M dimension full."""
    if requested is not None:
        tb = requested
    else:
        tb = 512
        while tb > 128 and B < 4 * tb:
            tb //= 2
    tb = _round_up(max(tb, SUBLANE_BF16), SUBLANE_BF16)
    return min(tb, _round_up(B, SUBLANE_BF16))


def prepare_params(params):
    """One-time parameter prep (call once, reuse for every forward):
    cast matmul weights to bf16 (MXU-native, halves weight HBM/VMEM),
    keep biases f32, pad the output columns to a lane-dense multiple of 128.
    Weights are stored [in_features, out_features] (transposed vs nn.Linear)."""
    n_output = params["w_out"].shape[1]
    n_out_p = _round_up(max(n_output, LANE), LANE)
    prepped = {
        "w_in": params["w_in"].astype(jnp.bfloat16),                     # [Ni, W]
        "b_in": params["b_in"].astype(jnp.float32),                      # [1,  W]
        "w_h": params["w_h"].astype(jnp.bfloat16),                       # [L, W, W]
        "b_h": params["b_h"].astype(jnp.float32),                        # [L, 1, W]
        "w_out": _pad_axis(params["w_out"], 1, n_out_p).astype(jnp.bfloat16),  # [W, Nop]
        "b_out": _pad_axis(params["b_out"], 1, n_out_p).astype(jnp.float32),   # [1, Nop]
    }
    return prepped, n_output


def densenet_forward(x, prepped, n_output, *, softmax, tile_b=None,
                     out_dtype=jnp.float32):
    """x: [B, n_input] float32.  prepped: output of prepare_params."""
    w_in, b_in = prepped["w_in"], prepped["b_in"]
    w_h, b_h = prepped["w_h"], prepped["b_h"]
    w_out, b_out = prepped["w_out"], prepped["b_out"]

    B, n_input = x.shape
    width = w_in.shape[1]
    n_out_p = w_out.shape[1]
    n_hidden_layers = w_h.shape[0]
    assert width % LANE == 0, "hidden width must be a multiple of 128"

    tile_b = _pick_tile_b(B, tile_b)
    b_p = _round_up(B, tile_b)
    if b_p != B:
        # Only the batch axis is ever padded, and only when needed.
        x = _pad_axis(x, 0, b_p)
    grid = (b_p // tile_b,)

    out_itemsize = 2 if out_dtype == jnp.bfloat16 else 4

    kernel = functools.partial(densenet_kernel,
                               n_hidden_layers=n_hidden_layers,
                               softmax=softmax,
                               n_output_real=n_output)

    # Advisory cost estimate for the XLA scheduler.
    flops = 2 * b_p * (n_input * width
                       + n_hidden_layers * width * width
                       + width * n_out_p)
    transcendentals = b_p * n_out_p if softmax else 0
    param_bytes = sum(int(a.size) * a.dtype.itemsize
                      for a in (w_in, b_in, w_h, b_h, w_out, b_out))
    bytes_accessed = (b_p * n_input * 4 + param_bytes
                      + b_p * n_out_p * out_itemsize)

    # Explicit scoped-VMEM budget: double-buffered params + double-buffered
    # activation tiles + live f32/bf16 intermediates, with margin.  Floor at
    # 32 MiB (raises v5e's 16 MiB default), cap at 48 MiB (v7x-safe).
    act_bytes = tile_b * (n_input * 4 + n_out_p * out_itemsize)
    inter_bytes = 4 * tile_b * width * 4
    vmem_limit = int(min(max(2 * param_bytes + 2 * act_bytes + inter_bytes
                             + (8 << 20), 32 << 20), 48 << 20))

    def full_spec(shape):
        nd = len(shape)
        return pl.BlockSpec(shape, lambda i: (0,) * nd)

    out = pl.pallas_call(
        kernel,
        out_shape=jax.ShapeDtypeStruct((b_p, n_out_p), out_dtype),
        grid_spec=pltpu.PrefetchScalarGridSpec(
            num_scalar_prefetch=0,
            grid=grid,
            in_specs=[
                # Activations: tiled over batch; last dim == full array dim
                # (legal even when < 128), cast to bf16 inside the kernel.
                pl.BlockSpec((tile_b, n_input), lambda i: (i, 0)),
                # Grid-invariant parameters (constant index_map -> no re-DMA).
                full_spec((n_input, width)),
                full_spec((1, width)),
                full_spec((n_hidden_layers, width, width)),
                full_spec((n_hidden_layers, 1, width)),
                full_spec((width, n_out_p)),
                full_spec((1, n_out_p)),
            ],
            out_specs=pl.BlockSpec((tile_b, n_out_p), lambda i: (i, 0)),
        ),
        compiler_params=pltpu.CompilerParams(
            dimension_semantics=("parallel",),
            vmem_limit_bytes=vmem_limit),
        cost_estimate=pl.CostEstimate(
            flops=flops,
            transcendentals=transcendentals,
            bytes_accessed=bytes_accessed),
    )(x, w_in, b_in, w_h, b_h, w_out, b_out)

    return out[:B, :n_output]


def init_params(key, n_input, n_output, width, n_hidden_layers):
    """Deterministic init mimicking nn.Linear's U(-1/sqrt(fan_in), +1/sqrt(fan_in))."""
    keys = jax.random.split(key, 2 * (n_hidden_layers + 2))

    def uniform(k, shape, fan_in):
        bound = 1.0 / jnp.sqrt(fan_in)
        return jax.random.uniform(k, shape, jnp.float32, -bound, bound)

    p = {}
    p["w_in"] = uniform(keys[0], (n_input, width), n_input)
    p["b_in"] = uniform(keys[1], (1, width), n_input)
    wh, bh = [], []
    for l in range(n_hidden_layers):
        wh.append(uniform(keys[2 + 2 * l], (width, width), width))
        bh.append(uniform(keys[3 + 2 * l], (1, width), width))
    p["w_h"] = jnp.stack(wh, axis=0)                       # [L, W, W]
    p["b_h"] = jnp.stack(bh, axis=0)                       # [L, 1, W]
    p["w_out"] = uniform(keys[-2], (width, n_output), width)
    p["b_out"] = uniform(keys[-1], (1, n_output), width)
    return p


def densenet_ref(x, params, *, softmax):
    h = jnp.maximum(x @ params["w_in"] + params["b_in"], 0.0)
    for l in range(params["w_h"].shape[0]):
        h = jnp.maximum(h @ params["w_h"][l] + params["b_h"][l], 0.0)
    y = h @ params["w_out"] + params["b_out"]
    if softmax:
        y = jax.nn.softmax(y, axis=-1)
    return y


if __name__ == "__main__":
    # Module config (consistent with DenseNet.__init__); batch sized so the
    # auto-picked tile gives a multi-step grid (overlap + megacore balance).
    n_input, n_output = 32, 16
    width, n_hidden_layers = 128, 2
    softmax = True
    batch = 512

    key = jax.random.PRNGKey(0)
    kx, kp = jax.random.split(key)
    x = jax.random.normal(kx, (batch, n_input), dtype=jnp.float32)
    params = init_params(kp, n_input, n_output, width, n_hidden_layers)

    # One-time parameter prep (pad/cast happens once, not per forward call).
    prepped, n_out_real = prepare_params(params)

    out = densenet_forward(x, prepped, n_out_real, softmax=softmax)
    out = jax.block_until_ready(out)

    ref = densenet_ref(x, params, softmax=softmax)
    assert out.shape == (batch, n_output)
    # bf16 matmul inputs + approx reciprocal -> looser tolerance than pure f32.
    max_err = float(jnp.max(jnp.abs(out - ref)))
    assert jnp.allclose(out, ref, atol=2e-2, rtol=2e-2), (
        f"mismatch vs JAX reference, max abs err={max_err}")

    print("KERNEL_OK")
</pallas_src>

<mosaic_0001>
module attributes {stable_mosaic.version = 11 : i64} {
  func.func @densenet_kernel(%arg0: i32, %arg1: memref<128x32xf32, #tpu.memory_space<vmem>>, %arg2: memref<32x128xbf16, #tpu.memory_space<vmem>>, %arg3: memref<1x128xf32, #tpu.memory_space<vmem>>, %arg4: memref<2x128x128xbf16, #tpu.memory_space<vmem>>, %arg5: memref<2x1x128xf32, #tpu.memory_space<vmem>>, %arg6: memref<128x128xbf16, #tpu.memory_space<vmem>>, %arg7: memref<1x128xf32, #tpu.memory_space<vmem>>, %arg8: memref<128x128xf32, #tpu.memory_space<vmem>>) attributes {dimension_semantics = [#tpu.dimension_semantics<parallel>], iteration_bounds = array<i64: 4>, scalar_prefetch = 0 : i64, scratch_operands = 0 : i64, tpu.core_type = #tpu.core_type<tc>, window_params = [{transform_indices = @transform_0, window_bounds = array<i64: 128, 32>}, {pipeline_mode = #tpu.pipeline_mode<synchronous>, transform_indices = @transform_1, window_bounds = array<i64: 32, 128>}, {pipeline_mode = #tpu.pipeline_mode<synchronous>, transform_indices = @transform_2, window_bounds = array<i64: 1, 128>}, {pipeline_mode = #tpu.pipeline_mode<synchronous>, transform_indices = @transform_3, window_bounds = array<i64: 2, 128, 128>}, {pipeline_mode = #tpu.pipeline_mode<synchronous>, transform_indices = @transform_4, window_bounds = array<i64: 2, 1, 128>}, {pipeline_mode = #tpu.pipeline_mode<synchronous>, transform_indices = @transform_5, window_bounds = array<i64: 128, 128>}, {pipeline_mode = #tpu.pipeline_mode<synchronous>, transform_indices = @transform_6, window_bounds = array<i64: 1, 128>}, {transform_indices = @transform_7, window_bounds = array<i64: 128, 128>}]} {
    %c0 = arith.constant 0 : index
    %c0_0 = arith.constant 0 : index
    %0 = vector.load %arg1[%c0, %c0_0] : memref<128x32xf32, #tpu.memory_space<vmem>>, vector<128x32xf32>
    %1 = arith.truncf %0 : vector<128x32xf32> to vector<128x32xbf16>
    %c0_1 = arith.constant 0 : index
    %c0_2 = arith.constant 0 : index
    %2 = vector.load %arg2[%c0_1, %c0_2] : memref<32x128xbf16, #tpu.memory_space<vmem>>, vector<32x128xbf16>
    %cst = arith.constant dense<0.000000e+00> : vector<128x128xf32>
    %3 = tpu.matmul %1, %2, %cst {dimension_numbers = #tpu.dot_dimension_numbers<[1], [0], [0], [1], [0, 0, 1, 1], [], []>} : vector<128x32xbf16>, vector<32x128xbf16>, vector<128x128xf32> -> vector<128x128xf32>
    %c0_3 = arith.constant 0 : index
    %c0_4 = arith.constant 0 : index
    %4 = vector.load %arg3[%c0_3, %c0_4] : memref<1x128xf32, #tpu.memory_space<vmem>>, vector<1x128xf32>
    %5 = vector.broadcast %4 : vector<1x128xf32> to vector<128x128xf32>
    %6 = arith.addf %3, %5 : vector<128x128xf32>
    %cst_5 = arith.constant 0.000000e+00 : f32
    %7 = vector.broadcast %cst_5 : f32 to vector<128x128xf32>
    %8 = arith.maximumf %6, %7 : vector<128x128xf32>
    %9 = arith.truncf %8 : vector<128x128xf32> to vector<128x128xbf16>
    %c0_6 = arith.constant 0 : index
    %c0_7 = arith.constant 0 : index
    %c0_8 = arith.constant 0 : index
    %10 = vector.load %arg4[%c0_6, %c0_7, %c0_8] : memref<2x128x128xbf16, #tpu.memory_space<vmem>>, vector<1x128x128xbf16>
    %11 = vector.shape_cast %10 : vector<1x128x128xbf16> to vector<128x128xbf16>
    %cst_9 = arith.constant dense<0.000000e+00> : vector<128x128xf32>
    %12 = tpu.matmul %9, %11, %cst_9 {dimension_numbers = #tpu.dot_dimension_numbers<[1], [0], [0], [1], [0, 0, 1, 1], [], []>} : vector<128x128xbf16>, vector<128x128xbf16>, vector<128x128xf32> -> vector<128x128xf32>
    %c0_10 = arith.constant 0 : index
    %c0_11 = arith.constant 0 : index
    %c0_12 = arith.constant 0 : index
    %13 = vector.load %arg5[%c0_10, %c0_11, %c0_12] : memref<2x1x128xf32, #tpu.memory_space<vmem>>, vector<1x1x128xf32>
    %14 = vector.shape_cast %13 : vector<1x1x128xf32> to vector<1x128xf32>
    %15 = vector.broadcast %14 : vector<1x128xf32> to vector<128x128xf32>
    %16 = arith.addf %12, %15 : vector<128x128xf32>
    %cst_13 = arith.constant 0.000000e+00 : f32
    %17 = vector.broadcast %cst_13 : f32 to vector<128x128xf32>
    %18 = arith.maximumf %16, %17 : vector<128x128xf32>
    %19 = arith.truncf %18 : vector<128x128xf32> to vector<128x128xbf16>
    %c1 = arith.constant 1 : index
    %c0_14 = arith.constant 0 : index
    %c0_15 = arith.constant 0 : index
    %20 = vector.load %arg4[%c1, %c0_14, %c0_15] : memref<2x128x128xbf16, #tpu.memory_space<vmem>>, vector<1x128x128xbf16>
    %21 = vector.shape_cast %20 : vector<1x128x128xbf16> to vector<128x128xbf16>
    %cst_16 = arith.constant dense<0.000000e+00> : vector<128x128xf32>
    %22 = tpu.matmul %19, %21, %cst_16 {dimension_numbers = #tpu.dot_dimension_numbers<[1], [0], [0], [1], [0, 0, 1, 1], [], []>} : vector<128x128xbf16>, vector<128x128xbf16>, vector<128x128xf32> -> vector<128x128xf32>
    %c1_17 = arith.constant 1 : index
    %c0_18 = arith.constant 0 : index
    %c0_19 = arith.constant 0 : index
    %23 = vector.load %arg5[%c1_17, %c0_18, %c0_19] : memref<2x1x128xf32, #tpu.memory_space<vmem>>, vector<1x1x128xf32>
    %24 = vector.shape_cast %23 : vector<1x1x128xf32> to vector<1x128xf32>
    %25 = vector.broadcast %24 : vector<1x128xf32> to vector<128x128xf32>
    %26 = arith.addf %22, %25 : vector<128x128xf32>
    %cst_20 = arith.constant 0.000000e+00 : f32
    %27 = vector.broadcast %cst_20 : f32 to vector<128x128xf32>
    %28 = arith.maximumf %26, %27 : vector<128x128xf32>
    %29 = arith.truncf %28 : vector<128x128xf32> to vector<128x128xbf16>
    %c0_21 = arith.constant 0 : index
    %c0_22 = arith.constant 0 : index
    %30 = vector.load %arg6[%c0_21, %c0_22] : memref<128x128xbf16, #tpu.memory_space<vmem>>, vector<128x128xbf16>
    %cst_23 = arith.constant dense<0.000000e+00> : vector<128x128xf32>
    %31 = tpu.matmul %29, %30, %cst_23 {dimension_numbers = #tpu.dot_dimension_numbers<[1], [0], [0], [1], [0, 0, 1, 1], [], []>} : vector<128x128xbf16>, vector<128x128xbf16>, vector<128x128xf32> -> vector<128x128xf32>
    %c0_24 = arith.constant 0 : index
    %c0_25 = arith.constant 0 : index
    %32 = vector.load %arg7[%c0_24, %c0_25] : memref<1x128xf32, #tpu.memory_space<vmem>>, vector<1x128xf32>
    %33 = vector.broadcast %32 : vector<1x128xf32> to vector<128x128xf32>
    %34 = arith.addf %31, %33 : vector<128x128xf32>
    %35 = tpu.iota {dimensions = array<i32: 1>} : vector<128x128xi32>
    %c16_i32 = arith.constant 16 : i32
    %36 = vector.broadcast %c16_i32 : i32 to vector<128x128xi32>
    %37 = arith.cmpi slt, %35, %36 : vector<128x128xi32>
    %cst_26 = arith.constant 0xFF800000 : f32
    %38 = vector.broadcast %cst_26 : f32 to vector<128x128xf32>
    %39 = arith.select %37, %34, %38 : vector<128x128xi1>, vector<128x128xf32>
    %cst_27 = arith.constant dense<0xFF800000> : vector<128xf32>
    %40 = vector.multi_reduction <maximumf>, %39, %cst_27 [1] : vector<128x128xf32> to vector<128xf32>
    %41 = vector.shape_cast %40 : vector<128xf32> to vector<128x1xf32>
    %42 = vector.broadcast %41 : vector<128x1xf32> to vector<128x128xf32>
    %43 = arith.subf %39, %42 : vector<128x128xf32>
    %44 = math.exp %43 : vector<128x128xf32>
    %cst_28 = arith.constant dense<0.000000e+00> : vector<128xf32>
    %45 = vector.multi_reduction <add>, %44, %cst_28 [1] : vector<128x128xf32> to vector<128xf32>
    %46 = vector.shape_cast %45 : vector<128xf32> to vector<128x1xf32>
    %47 = tpu.reciprocal %46 {approx = true} : vector<128x1xf32> -> vector<128x1xf32>
    %48 = vector.broadcast %47 : vector<128x1xf32> to vector<128x128xf32>
    %49 = arith.mulf %44, %48 : vector<128x128xf32>
    %c0_29 = arith.constant 0 : index
    %c0_30 = arith.constant 0 : index
    %50 = vector.load %arg8[%c0_29, %c0_30] : memref<128x128xf32, #tpu.memory_space<vmem>>, vector<128x128xf32>
    tpu.vector_store %arg8[%c0_29, %c0_30], %49 {strides = array<i32>} : memref<128x128xf32, #tpu.memory_space<vmem>>, vector<128x128xf32>,
    return
  }
  func.func @transform_0(%arg0: i32) -> (i32, i32) {
    %c0_i32 = arith.constant 0 : i32
    %c0_i32_0 = arith.constant 0 : i32
    return %arg0, %c0_i32 : i32, i32
  }
  func.func @transform_1(%arg0: i32) -> (i32, i32) {
    %c0_i32 = arith.constant 0 : i32
    %c0_i32_0 = arith.constant 0 : i32
    %c0_i32_1 = arith.constant 0 : i32
    return %c0_i32, %c0_i32_0 : i32, i32
  }
  func.func @transform_2(%arg0: i32) -> (i32, i32) {
    %c0_i32 = arith.constant 0 : i32
    %c0_i32_0 = arith.constant 0 : i32
    %c0_i32_1 = arith.constant 0 : i32
    return %c0_i32, %c0_i32_0 : i32, i32
  }
  func.func @transform_3(%arg0: i32) -> (i32, i32, i32) {
    %c0_i32 = arith.constant 0 : i32
    %c0_i32_0 = arith.constant 0 : i32
    %c0_i32_1 = arith.constant 0 : i32
    %c0_i32_2 = arith.constant 0 : i32
    return %c0_i32, %c0_i32_0, %c0_i32_1 : i32, i32, i32
  }
  func.func @transform_4(%arg0: i32) -> (i32, i32, i32) {
    %c0_i32 = arith.constant 0 : i32
    %c0_i32_0 = arith.constant 0 : i32
    %c0_i32_1 = arith.constant 0 : i32
    %c0_i32_2 = arith.constant 0 : i32
    return %c0_i32, %c0_i32_0, %c0_i32_1 : i32, i32, i32
  }
  func.func @transform_5(%arg0: i32) -> (i32, i32) {
    %c0_i32 = arith.constant 0 : i32
    %c0_i32_0 = arith.constant 0 : i32
    %c0_i32_1 = arith.constant 0 : i32
    return %c0_i32, %c0_i32_0 : i32, i32
  }
  func.func @transform_6(%arg0: i32) -> (i32, i32) {
    %c0_i32 = arith.constant 0 : i32
    %c0_i32_0 = arith.constant 0 : i32
    %c0_i32_1 = arith.constant 0 : i32
    return %c0_i32, %c0_i32_0 : i32, i32
  }
  func.func @transform_7(%arg0: i32) -> (i32, i32) {
    %c0_i32 = arith.constant 0 : i32
    %c0_i32_0 = arith.constant 0 : i32
    return %arg0, %c0_i32 : i32, i32
  }
}

</mosaic_0001>

<llo_original>
// kernel: tpu_custom_call.1
$region0: #{tpu_custom_call.1}
  #allocation0 [shape = 'u32[]', space=smem, size = 0x4, offset = 0x4, fixed_abs, tag = 'smem constant byte address 0x4 - core index']
  #allocation1 [shape = 'u32[144,128]{1,0:T(1,128)}', space=vmem, size = 0x12000, scoped, tag = 'internal scratch']
  %s0 = inlined_call_operand.vmem [shape: f32[512,32], index: 0, kind: input, shape index: {}]
  %s1 = inlined_call_operand.vmem [shape: bf16[32,128], index: 1, kind: input, shape index: {}]
  %s2 = inlined_call_operand.vmem [shape: f32[1,128], index: 2, kind: input, shape index: {}]
  %s3 = inlined_call_operand.vmem [shape: bf16[2,128,128], index: 3, kind: input, shape index: {}]
  %s4 = inlined_call_operand.vmem [shape: f32[2,1,128], index: 4, kind: input, shape index: {}]
  %s5 = inlined_call_operand.vmem [shape: bf16[128,128], index: 5, kind: input, shape index: {}]
  %s6 = inlined_call_operand.vmem [shape: f32[1,128], index: 6, kind: input, shape index: {}]
  %s7 = inlined_call_operand.hbm [shape: f32[512,128], index: 7, kind: output, shape index: {}]
  %s8 = sld [smem:[#allocation0]]
  $region61: #{tpu_custom_call.1} parent=0
    _
  %s10 = ssub.s32 1, %s8
  %s11 = scalar_select 0, %s10, %s8
  $region1: #{tpu_custom_call.1} parent=0
    #allocation2 [shape = 'u8[131072]{0}', space=vmem, size = 0x20000, scoped, tag = 'output window, operand 0']
    #allocation3 [shape = 's32[2]{0}', space=sflag, size = 0x8, scoped, tag = 'scoped memory for tpu_custom_call.1']
    %12 = vsyncpa [#allocation3], 0
    %s13 = scalar_lea.sflag [#allocation3], 1
    %14 = vsyncpa %s13, 0
    loop: start=0, step=1, limit=6
    $region2: #{tpu_custom_call.1} parent=1 // loop_pre_header
      _
    $region3: #{tpu_custom_call.1} parent=1 // loop_header
      %s16 = sphi 0, %s20
      %p17 = scmp.ge.s32.totalorder %s16, 6
      %s26 = sphi 0, %s28
      %s29 = sphi 0, %s26
      %s30 = sphi 0, %s29
      %s46 = sphi 0, %s30
      %s50 = sphi 0, %s50
      %s52 = sphi 0, %s50
      %s53 = sphi 0, %s52
      %s67 = sphi 0, %s53
      %s71 = sphi 0, %s71
      %s73 = sphi 0, %s71
      %s74 = sphi 0, %s73
      %s88 = sphi 0, %s74
      %s92 = sphi 0, %s92
      %s94 = sphi 0, %s92
      %s95 = sphi 0, %s94
      %s109 = sphi 0, %s95
      %s113 = sphi 0, %s113
      %s115 = sphi 0, %s113
      %s116 = sphi 0, %s115
      %s130 = sphi 0, %s116
      %s134 = sphi 0, %s134
      %s136 = sphi 0, %s134
      %s137 = sphi 0, %s136
      %s151 = sphi 0, %s137
      %s155 = sphi 0, %s155
      %s157 = sphi 0, %s155
      %s158 = sphi 0, %s157
      %s172 = sphi 0, %s158
      %s178 = sphi 0, %s180
      %s181 = sphi 0, %s178
      %s182 = sphi 0, %s181
      %s198 = sphi 0, %s182
    $region4: #{tpu_custom_call.1} parent=1 // loop_header_branch
      %19 = sbr.rel (%p17) target = $region8
    $region5: #{tpu_custom_call.1} parent=1 // loop_body
      %s21 = ssub.s32 %s16, 1
      %s22 = ssub.s32 %s16, 2
      %s23 = sadd.s32 %s16, 1
      %s24 = ssub.s32 %s16, %s23
      %p25 = scmp.eq.s32.totalorder %s24, 0
      %s27 = sadd.s32 %s26, 1
      %s28 = scalar_select %p25, %s26, %s27
      %p31 = pneg %p25
      %p32 = scmp.eq.s32.totalorder %s16, 3
      %p33 = por %p31, %p32
      %p34 = scmp.ne.s32.totalorder %s26, %s29
      %p35 = scmp.eq.s32.totalorder %s16, 0
      %p36 = por %p34, %p35
      %p37 = scmp.ne.s32.totalorder %s26, %s29
      %p38 = scmp.eq.s32.totalorder %s21, 3
      %p39 = por %p37, %p38
      %p40 = scmp.ne.s32.totalorder %s29, %s30
      %p41 = scmp.eq.s32.totalorder %s21, 0
      %p42 = por %p40, %p41
      %p43 = scmp.ne.s32.totalorder %s29, %s30
      %p44 = scmp.eq.s32.totalorder %s22, 3
      %p45 = por %p43, %p44
      %p47 = scmp.ne.s32.totalorder %s30, %s46
      %p48 = scmp.eq.s32.totalorder %s22, 0
      %p49 = por %p47, %p48
      %s51 = sadd.s32 %s50, 1
      %p54 = scmp.eq.s32.totalorder %s16, 3
      %p55 = scmp.ne.s32.totalorder %s50, %s52
      %p56 = scmp.eq.s32.totalorder %s16, 0
      %p57 = por %p55, %p56
      %p58 = scmp.ne.s32.totalorder %s50, %s52
      %p59 = scmp.eq.s32.totalorder %s21, 3
      %p60 = por %p58, %p59
      %p61 = scmp.ne.s32.totalorder %s52, %s53
      %p62 = scmp.eq.s32.totalorder %s21, 0
      %p63 = por %p61, %p62
      %p64 = scmp.ne.s32.totalorder %s52, %s53
      %p65 = scmp.eq.s32.totalorder %s22, 3
      %p66 = por %p64, %p65
      %p68 = scmp.ne.s32.totalorder %s53, %s67
      %p69 = scmp.eq.s32.totalorder %s22, 0
      %p70 = por %p68, %p69
      %s72 = sadd.s32 %s71, 1
      %p75 = scmp.eq.s32.totalorder %s16, 3
      %p76 = scmp.ne.s32.totalorder %s71, %s73
      %p77 = scmp.eq.s32.totalorder %s16, 0
      %p78 = por %p76, %p77
      %p79 = scmp.ne.s32.totalorder %s71, %s73
      %p80 = scmp.eq.s32.totalorder %s21, 3
      %p81 = por %p79, %p80
      %p82 = scmp.ne.s32.totalorder %s73, %s74
      %p83 = scmp.eq.s32.totalorder %s21, 0
      %p84 = por %p82, %p83
      %p85 = scmp.ne.s32.totalorder %s73, %s74
      %p86 = scmp.eq.s32.totalorder %s22, 3
      %p87 = por %p85, %p86
      %p89 = scmp.ne.s32.totalorder %s74, %s88
      %p90 = scmp.eq.s32.totalorder %s22, 0
      %p91 = por %p89, %p90
      %s93 = sadd.s32 %s92, 1
      %p96 = scmp.eq.s32.totalorder %s16, 3
      %p97 = scmp.ne.s32.totalorder %s92, %s94
      %p98 = scmp.eq.s32.totalorder %s16, 0
      %p99 = por %p97, %p98
      %p100 = scmp.ne.s32.totalorder %s92, %s94
      %p101 = scmp.eq.s32.totalorder %s21, 3
      %p102 = por %p100, %p101
      %p103 = scmp.ne.s32.totalorder %s94, %s95
      %p104 = scmp.eq.s32.totalorder %s21, 0
      %p105 = por %p103, %p104
      %p106 = scmp.ne.s32.totalorder %s94, %s95
      %p107 = scmp.eq.s32.totalorder %s22, 3
      %p108 = por %p106, %p107
      %p110 = scmp.ne.s32.totalorder %s95, %s109
      %p111 = scmp.eq.s32.totalorder %s22, 0
      %p112 = por %p110, %p111
      %s114 = sadd.s32 %s113, 1
      %p117 = scmp.eq.s32.totalorder %s16, 3
      %p118 = scmp.ne.s32.totalorder %s113, %s115
      %p119 = scmp.eq.s32.totalorder %s16, 0
      %p120 = por %p118, %p119
      %p121 = scmp.ne.s32.totalorder %s113, %s115
      %p122 = scmp.eq.s32.totalorder %s21, 3
      %p123 = por %p121, %p122
      %p124 = scmp.ne.s32.totalorder %s115, %s116
      %p125 = scmp.eq.s32.totalorder %s21, 0
      %p126 = por %p124, %p125
      %p127 = scmp.ne.s32.totalorder %s115, %s116
      %p128 = scmp.eq.s32.totalorder %s22, 3
      %p129 = por %p127, %p128
      %p131 = scmp.ne.s32.totalorder %s116, %s130
      %p132 = scmp.eq.s32.totalorder %s22, 0
      %p133 = por %p131, %p132
      %s135 = sadd.s32 %s134, 1
      %p138 = scmp.eq.s32.totalorder %s16, 3
      %p139 = scmp.ne.s32.totalorder %s134, %s136
      %p140 = scmp.eq.s32.totalorder %s16, 0
      %p141 = por %p139, %p140
      %p142 = scmp.ne.s32.totalorder %s134, %s136
      %p143 = scmp.eq.s32.totalorder %s21, 3
      %p144 = por %p142, %p143
      %p145 = scmp.ne.s32.totalorder %s136, %s137
      %p146 = scmp.eq.s32.totalorder %s21, 0
      %p147 = por %p145, %p146
      %p148 = scmp.ne.s32.totalorder %s136, %s137
      %p149 = scmp.eq.s32.totalorder %s22, 3
      %p150 = por %p148, %p149
      %p152 = scmp.ne.s32.totalorder %s137, %s151
      %p153 = scmp.eq.s32.totalorder %s22, 0
      %p154 = por %p152, %p153
      %s156 = sadd.s32 %s155, 1
      %p159 = scmp.eq.s32.totalorder %s16, 3
      %p160 = scmp.ne.s32.totalorder %s155, %s157
      %p161 = scmp.eq.s32.totalorder %s16, 0
      %p162 = por %p160, %p161
      %p163 = scmp.ne.s32.totalorder %s155, %s157
      %p164 = scmp.eq.s32.totalorder %s21, 3
      %p165 = por %p163, %p164
      %p166 = scmp.ne.s32.totalorder %s157, %s158
      %p167 = scmp.eq.s32.totalorder %s21, 0
      %p168 = por %p166, %p167
      %p169 = scmp.ne.s32.totalorder %s157, %s158
      %p170 = scmp.eq.s32.totalorder %s22, 3
      %p171 = por %p169, %p170
      %p173 = scmp.ne.s32.totalorder %s158, %s172
      %p174 = scmp.eq.s32.totalorder %s22, 0
      %p175 = por %p173, %p174
      %s176 = ssub.s32 %s16, %s23
      %p177 = scmp.eq.s32.totalorder %s176, 0
      %s179 = sadd.s32 %s178, 1
      %s180 = scalar_select %p177, %s178, %s179
      %p183 = pneg %p177
      %p184 = scmp.eq.s32.totalorder %s16, 3
      %p185 = por %p183, %p184
      %p186 = scmp.ne.s32.totalorder %s178, %s181
      %p187 = scmp.eq.s32.totalorder %s16, 0
      %p188 = por %p186, %p187
      %p189 = scmp.ne.s32.totalorder %s178, %s181
      %p190 = scmp.eq.s32.totalorder %s21, 3
      %p191 = por %p189, %p190
      %p192 = scmp.ne.s32.totalorder %s181, %s182
      %p193 = scmp.eq.s32.totalorder %s21, 0
      %p194 = por %p192, %p193
      %p195 = scmp.ne.s32.totalorder %s181, %s182
      %p196 = scmp.eq.s32.totalorder %s22, 3
      %p197 = por %p195, %p196
      %p199 = scmp.ne.s32.totalorder %s182, %s198
      %p200 = scmp.eq.s32.totalorder %s22, 0
      %p201 = por %p199, %p200
      %p202 = scmp.le.s32.totalorder 1, %s16
      %p203 = scmp.lt.s32.totalorder %s16, 5
      %p204 = pnand %p202, %p203
      %p205 = pneg %p204
      // Predicated region
      $region9: #{tpu_custom_call.1} parent=5 // pred_check
        _
      $region10: #{tpu_custom_call.1} parent=5 // pred_check_branch
        %207 = sbr.rel (%p204) target = $region12
      $region11: #{tpu_custom_call.1} parent=5 // pred_region
        %s208 = ssub.s32 %s16, 1
        // Predicated region
        $region13: #{tpu_custom_call.1} parent=11 // pred_check
          %p209 = pneg %p63
        $region14: #{tpu_custom_call.1} parent=11 // pred_check_branch
          %211 = sbr.rel (%p209) target = $region16
        $region15: #{tpu_custom_call.1} parent=11 // pred_region
          _
        $region16: #{tpu_custom_call.1} parent=11 // pred_fallthru
          _
        // Predicated region
        $region17: #{tpu_custom_call.1} parent=11 // pred_check
          %p212 = pneg %p84
        $region18: #{tpu_custom_call.1} parent=11 // pred_check_branch
          %214 = sbr.rel (%p212) target = $region20
        $region19: #{tpu_custom_call.1} parent=11 // pred_region
          _
        $region20: #{tpu_custom_call.1} parent=11 // pred_fallthru
          _
        // Predicated region
        $region21: #{tpu_custom_call.1} parent=11 // pred_check
          %p215 = pneg %p105
        $region22: #{tpu_custom_call.1} parent=11 // pred_check_branch
          %217 = sbr.rel (%p215) target = $region24
        $region23: #{tpu_custom_call.1} parent=11 // pred_region
          _
        $region24: #{tpu_custom_call.1} parent=11 // pred_fallthru
          _
        // Predicated region
        $region25: #{tpu_custom_call.1} parent=11 // pred_check
          %p218 = pneg %p126
        $region26: #{tpu_custom_call.1} parent=11 // pred_check_branch
          %220 = sbr.rel (%p218) target = $region28
        $region27: #{tpu_custom_call.1} parent=11 // pred_region
          _
        $region28: #{tpu_custom_call.1} parent=11 // pred_fallthru
          _
        // Predicated region
        $region29: #{tpu_custom_call.1} parent=11 // pred_check
          %p221 = pneg %p147
        $region30: #{tpu_custom_call.1} parent=11 // pred_check_branch
          %223 = sbr.rel (%p221) target = $region32
        $region31: #{tpu_custom_call.1} parent=11 // pred_region
          _
        $region32: #{tpu_custom_call.1} parent=11 // pred_fallthru
          _
        // Predicated region
        $region33: #{tpu_custom_call.1} parent=11 // pred_check
          %p224 = pneg %p168
        $region34: #{tpu_custom_call.1} parent=11 // pred_check_branch
          %226 = sbr.rel (%p224) target = $region36
        $region35: #{tpu_custom_call.1} parent=11 // pred_region
          _
        $region36: #{tpu_custom_call.1} parent=11 // pred_fallthru
          _
      $region12: #{tpu_custom_call.1} parent=5 // pred_fallthru
        _
      %p227 = scmp.lt.s32.totalorder %s16, 4
      // Predicated region
      $region37: #{tpu_custom_call.1} parent=5 // pred_check
        %p228 = pneg %p227
      $region38: #{tpu_custom_call.1} parent=5 // pred_check_branch
        %230 = sbr.rel (%p228) target = $region40
      $region39: #{tpu_custom_call.1} parent=5 // pred_region
        // Predicated region
        $region41: #{tpu_custom_call.1} parent=39 // pred_check
          %p231 = pneg %p36
        $region42: #{tpu_custom_call.1} parent=39 // pred_check_branch
          %233 = sbr.rel (%p231) target = $region44
        $region43: #{tpu_custom_call.1} parent=39 // pred_region
          %s234 = smul.u32 16, %s16
          %p235 = scmp.lt.s32.totalorder %s234, 63
          %s236 = scalar_select %p235, %s234, 63
          %s237 = smul.addr %s236, 8
          %s238 = scalar_lea.vmem %s0, %s237
          %s239 = smul.u32 16, %s16
        $region44: #{tpu_custom_call.1} parent=39 // pred_fallthru
          _
      $region40: #{tpu_custom_call.1} parent=5 // pred_fallthru
        _
      %p240 = scmp.le.s32.totalorder 1, %s16
      %p241 = scmp.lt.s32.totalorder %s16, 5
      %p242 = pnand %p240, %p241
      %p243 = pneg %p242
      // Predicated region
      $region45: #{tpu_custom_call.1} parent=5 // pred_check
        _
      $region46: #{tpu_custom_call.1} parent=5 // pred_check_branch
        %245 = sbr.rel (%p242) target = $region48
      $region47: #{tpu_custom_call.1} parent=5 // pred_region
        %s246 = ssub.s32 %s16, 1
        %s247 = smul.u32 16, %s21
        %p248 = scmp.lt.s32.totalorder %s247, 63
        %s249 = scalar_select %p248, %s247, 63
        %s250 = smul.addr %s249, 8
        %s251 = scalar_lea.vmem %s0, %s250
        %p252 = pneg %p42
        %p253 = pneg %p39
        %p254 = pneg %p63
        %p255 = pneg %p60
        %p256 = pneg %p84
        %p257 = pneg %p81
        %p258 = pneg %p105
        %p259 = pneg %p102
        %p260 = pneg %p126
        %p261 = pneg %p123
        %p262 = pneg %p147
        %p263 = pneg %p144
        %p264 = pneg %p168
        %p265 = pneg %p165
        %p266 = pneg %p194
        %p267 = pneg %p191
        %s268 = sand.u32 %s181, 1
        %s269 = scalar_lea.sflag [#allocation3], %s268
        %s270 = sand.u32 %s181, 1
        %s271 = smul.addr %s270, 128
        %s272 = scalar_lea.vmem [#allocation2], %s271
        %s273 = smul.u32 16, %s21
        %p274 = scmp.lt.s32.totalorder %s273, 63
        %s275 = scalar_select %p274, %s273, 63
        %s276 = smul.addr %s275, 8
        %s277 = scalar_lea.vmem %s0, %s276
        %s278 = smul.u32 16, %s21
        %s279 = smul.u32 16, %s21
        %v281 = vld [vmem:[%s277] sm:$0xff]
        %v282 = vld [vmem:[%s277 + $0x8] sm:$0xff]
        %v283 = vld [vmem:[%s277 + $0x10] sm:$0xff]
        %v284 = vld [vmem:[%s277 + $0x18] sm:$0xff]
        %v285 = vld [vmem:[%s277 + $0x20] sm:$0xff]
        %v286 = vld [vmem:[%s277 + $0x28] sm:$0xff]
        %v287 = vld [vmem:[%s277 + $0x30] sm:$0xff]
        %v288 = vld [vmem:[%s277 + $0x38] sm:$0xff]
        %v289 = vld [vmem:[%s277 + $0x40] sm:$0xff]
        %v290 = vld [vmem:[%s277 + $0x48] sm:$0xff]
        %v291 = vld [vmem:[%s277 + $0x50] sm:$0xff]
        %v292 = vld [vmem:[%s277 + $0x58] sm:$0xff]
        %v293 = vld [vmem:[%s277 + $0x60] sm:$0xff]
        %v294 = vld [vmem:[%s277 + $0x68] sm:$0xff]
        %v295 = vld [vmem:[%s277 + $0x70] sm:$0xff]
        %v296 = vld [vmem:[%s277 + $0x78] sm:$0xff]
        %v297 = vpack.c.bf16 %v282, %v281
        %v298 = vpack.c.bf16 %v284, %v283
        %v299 = vpack.c.bf16 %v286, %v285
        %v300 = vpack.c.bf16 %v288, %v287
        %v301 = vpack.c.bf16 %v290, %v289
        %v302 = vpack.c.bf16 %v292, %v291
        %v303 = vpack.c.bf16 %v294, %v293
        %v304 = vpack.c.bf16 %v296, %v295
        %v305 = vld [vmem:[%s1] sm:$0xf]
        %v306 = vld [vmem:[%s1 + $0x4] sm:$0xf]
        %v307 = vld [vmem:[%s1 + $0x8] sm:$0xf]
        %v308 = vld [vmem:[%s1 + $0xc] sm:$0xf]
        %v309 = vld [vmem:[%s2] sm:$0x1]
        %v311 = vlaneseq
        %v312 = vshrl.u32 %v311, 7
        %v313 = vsub.s32 0, %v312
        %v314 = vrot.slane %v309, %v313
        %v320 = vunpack.c.l.b16 %v305
        %v321 = vunpack.c.l.b16 %v306
        %v322 = vunpack.c.l.b16 %v307
        %v323 = vunpack.c.l.b16 %v308
        %v324 = vpack.c.b16 %v321, %v320
        %v325 = vpack.c.b16 %v323, %v322
        %vm328 = vcmask 261120
        %v330 = vsel %vm328, %v297, 0
        %v333 = vsel %vm328, %v298, 0
        %v336 = vsel %vm328, %v299, 0
        %v339 = vsel %vm328, %v300, 0
        %v342 = vsel %vm328, %v301, 0
        %v345 = vsel %vm328, %v302, 0
        %v348 = vsel %vm328, %v303, 0
        %v351 = vsel %vm328, %v304, 0
        %353 = vmatprep.subr.bf16.mxu0 0
        %354 = vmatpush1.bf16.msra.mxu0 %v324
        %355 = vmatprep.subr.bf16.mxu0 0
        %356 = vmatpush1.bf16.msra.mxu0 %v325
        %357 = vmatprep.subr.bf16.mxu0 0
        %358 = vmatpush1.bf16.msra.mxu0 0
        %359 = vmatprep.subr.bf16.mxu0 0
        %360 = vmatpush1.bf16.msra.mxu0 0
        %361 = vmatprep.subr.bf16.mxu0 0
        %362 = vmatpush1.bf16.msra.mxu0 0
        %363 = vmatprep.subr.bf16.mxu0 0
        %364 = vmatpush1.bf16.msra.mxu0 0
        %365 = vmatprep.subr.bf16.mxu0 0
        %366 = vmatpush1.bf16.msra.mxu0 0
        %367 = vmatprep.subr.bf16.mxu0 0
        %368 = vmatpush1.bf16.msra.mxu0 0
        %369 = vmatprep.subr.bf16.mxu0 0
        %370 = vmatpush1.bf16.msra.mxu0 0
        %371 = vmatprep.subr.bf16.mxu0 0
        %372 = vmatpush1.bf16.msra.mxu0 0
        %373 = vmatprep.subr.bf16.mxu0 0
        %374 = vmatpush1.bf16.msra.mxu0 0
        %375 = vmatprep.subr.bf16.mxu0 0
        %376 = vmatpush1.bf16.msra.mxu0 0
        %377 = vmatprep.subr.bf16.mxu0 0
        %378 = vmatpush1.bf16.msra.mxu0 0
        %379 = vmatprep.subr.bf16.mxu0 0
        %380 = vmatpush1.bf16.msra.mxu0 0
        %381 = vmatprep.subr.bf16.mxu0 0
        %382 = vmatpush1.bf16.msra.mxu0 0
        %383 = vmatprep.subr.bf16.mxu0 0
        %384 = vmatpush1.bf16.msra.mxu0 0
        %385 = vmatprep.mubr.bf16.mxu0 0
        %386 = vmatmul.mubr.bf16.gmra.mrb[0].mxu0 %v330
        %v387 = vpop.f32.mrb[0].mxu0
        %v388 = vadd.f32 %v314, %v387
        %v389 = vpop.f32.mrb[0].mxu0
        %v390 = vpop.f32.mrb[0].mxu0
        %v391 = vadd.f32 %v314, %v390
        %v392 = vpop.f32.mrb[0].mxu0
        %393 = vmatprep.mubr.bf16.mxu0 0
        %394 = vmatmul.mubr.bf16.gmra.mrb[0].mxu0 %v333
        %v395 = vpop.f32.mrb[0].mxu0
        %v396 = vadd.f32 %v314, %v395
        %v397 = vpop.f32.mrb[0].mxu0
        %v398 = vpop.f32.mrb[0].mxu0
        %v399 = vadd.f32 %v314, %v398
        %v400 = vpop.f32.mrb[0].mxu0
        %401 = vmatprep.mubr.bf16.mxu0 0
        %402 = vmatmul.mubr.bf16.gmra.mrb[0].mxu0 %v336
        %v403 = vpop.f32.mrb[0].mxu0
        %v404 = vadd.f32 %v314, %v403
        %v405 = vpop.f32.mrb[0].mxu0
        %v406 = vpop.f32.mrb[0].mxu0
        %v407 = vadd.f32 %v314, %v406
        %v408 = vpop.f32.mrb[0].mxu0
        %409 = vmatprep.mubr.bf16.mxu0 0
        %410 = vmatmul.mubr.bf16.gmra.mrb[0].mxu0 %v339
        %v411 = vpop.f32.mrb[0].mxu0
        %v412 = vadd.f32 %v314, %v411
        %v413 = vpop.f32.mrb[0].mxu0
        %v414 = vpop.f32.mrb[0].mxu0
        %v415 = vadd.f32 %v314, %v414
        %v416 = vpop.f32.mrb[0].mxu0
        %417 = vmatprep.mubr.bf16.mxu0 0
        %418 = vmatmul.mubr.bf16.gmra.mrb[0].mxu0 %v342
        %v419 = vpop.f32.mrb[0].mxu0
        %v420 = vadd.f32 %v314, %v419
        %v421 = vpop.f32.mrb[0].mxu0
        %v422 = vpop.f32.mrb[0].mxu0
        %v423 = vadd.f32 %v314, %v422
        %v424 = vpop.f32.mrb[0].mxu0
        %425 = vmatprep.mubr.bf16.mxu0 0
        %426 = vmatmul.mubr.bf16.gmra.mrb[0].mxu0 %v345
        %v427 = vpop.f32.mrb[0].mxu0
        %v428 = vadd.f32 %v314, %v427
        %v429 = vpop.f32.mrb[0].mxu0
        %v430 = vpop.f32.mrb[0].mxu0
        %v431 = vadd.f32 %v314, %v430
        %v432 = vpop.f32.mrb[0].mxu0
        %433 = vmatprep.mubr.bf16.mxu0 0
        %434 = vmatmul.mubr.bf16.gmra.mrb[0].mxu0 %v348
        %v435 = vpop.f32.mrb[0].mxu0
        %v436 = vadd.f32 %v314, %v435
        %v437 = vpop.f32.mrb[0].mxu0
        %v438 = vpop.f32.mrb[0].mxu0
        %v439 = vadd.f32 %v314, %v438
        %v440 = vpop.f32.mrb[0].mxu0
        %441 = vmatprep.mubr.bf16.mxu0 0
        %442 = vmatmul.mubr.bf16.gmra.mrb[0].mxu0 %v351
        %v443 = vpop.f32.mrb[0].mxu0
        %v444 = vadd.f32 %v314, %v443
        %v445 = vpop.f32.mrb[0].mxu0
        %v446 = vpop.f32.mrb[0].mxu0
        %v447 = vadd.f32 %v314, %v446
        %v448 = vpop.f32.mrb[0].mxu0
        %449 = vdwg.mxu0
        %v450 = vmax.f32 %v388, 0.0
        %v451 = vmax.f32 %v391, 0.0
        %v452 = vmax.f32 %v396, 0.0
        %v453 = vmax.f32 %v399, 0.0
        %v454 = vmax.f32 %v404, 0.0
        %v455 = vmax.f32 %v407, 0.0
        %v456 = vmax.f32 %v412, 0.0
        %v457 = vmax.f32 %v415, 0.0
        %v458 = vmax.f32 %v420, 0.0
        %v459 = vmax.f32 %v423, 0.0
        %v460 = vmax.f32 %v428, 0.0
        %v461 = vmax.f32 %v431, 0.0
        %v462 = vmax.f32 %v436, 0.0
        %v463 = vmax.f32 %v439, 0.0
        %v464 = vmax.f32 %v444, 0.0
        %v465 = vmax.f32 %v447, 0.0
        %v466 = vpack.c.bf16 %v451, %v450
        %v467 = vpack.c.bf16 %v453, %v452
        %v468 = vpack.c.bf16 %v455, %v454
        %v469 = vpack.c.bf16 %v457, %v456
        %v470 = vpack.c.bf16 %v459, %v458
        %v471 = vpack.c.bf16 %v461, %v460
        %v472 = vpack.c.bf16 %v463, %v462
        %v473 = vpack.c.bf16 %v465, %v464
        %v474 = vld [vmem:[%s3] sm:$0xf]
        %v475 = vld [vmem:[%s3 + $0x4] sm:$0xf]
        %v476 = vld [vmem:[%s3 + $0x8] sm:$0xf]
        %v477 = vld [vmem:[%s3 + $0xc] sm:$0xf]
        %v478 = vld [vmem:[%s3 + $0x10] sm:$0xf]
        %v479 = vld [vmem:[%s3 + $0x14] sm:$0xf]
        %v480 = vld [vmem:[%s3 + $0x18] sm:$0xf]
        %v481 = vld [vmem:[%s3 + $0x1c] sm:$0xf]
        %v482 = vld [vmem:[%s3 + $0x20] sm:$0xf]
        %v483 = vld [vmem:[%s3 + $0x24] sm:$0xf]
        %v484 = vld [vmem:[%s3 + $0x28] sm:$0xf]
        %v485 = vld [vmem:[%s3 + $0x2c] sm:$0xf]
        %v486 = vld [vmem:[%s3 + $0x30] sm:$0xf]
        %v487 = vld [vmem:[%s3 + $0x34] sm:$0xf]
        %v488 = vld [vmem:[%s3 + $0x38] sm:$0xf]
        %v489 = vld [vmem:[%s3 + $0x3c] sm:$0xf]
        %v490 = vld [vmem:[%s4] sm:$0x1]
        %v492 = vlaneseq
        %v493 = vshrl.u32 %v492, 7
        %v494 = vsub.s32 0, %v493
        %v495 = vrot.slane %v490, %v494
        %v513 = vunpack.c.l.b16 %v474
        %v514 = vunpack.c.l.b16 %v475
        %v515 = vunpack.c.l.b16 %v476
        %v516 = vunpack.c.l.b16 %v477
        %v517 = vunpack.c.l.b16 %v478
        %v518 = vunpack.c.l.b16 %v479
        %v519 = vunpack.c.l.b16 %v480
        %v520 = vunpack.c.l.b16 %v481
        %v521 = vunpack.c.l.b16 %v482
        %v522 = vunpack.c.l.b16 %v483
        %v523 = vunpack.c.l.b16 %v484
        %v524 = vunpack.c.l.b16 %v485
        %v525 = vunpack.c.l.b16 %v486
        %v526 = vunpack.c.l.b16 %v487
        %v527 = vunpack.c.l.b16 %v488
        %v528 = vunpack.c.l.b16 %v489
        %v529 = vpack.c.b16 %v514, %v513
        %v530 = vpack.c.b16 %v516, %v515
        %v531 = vpack.c.b16 %v518, %v517
        %v532 = vpack.c.b16 %v520, %v519
        %v533 = vpack.c.b16 %v522, %v521
        %v534 = vpack.c.b16 %v524, %v523
        %v535 = vpack.c.b16 %v526, %v525
        %v536 = vpack.c.b16 %v528, %v527
        %545 = vmatprep.subr.bf16.mxu0 0
        %546 = vmatpush1.bf16.msra.mxu0 %v529
        %547 = vmatprep.subr.bf16.mxu0 0
        %548 = vmatpush1.bf16.msra.mxu0 %v530
        %549 = vmatprep.subr.bf16.mxu0 0
        %550 = vmatpush1.bf16.msra.mxu0 %v531
        %551 = vmatprep.subr.bf16.mxu0 0
        %552 = vmatpush1.bf16.msra.mxu0 %v532
        %553 = vmatprep.subr.bf16.mxu0 0
        %554 = vmatpush1.bf16.msra.mxu0 %v533
        %555 = vmatprep.subr.bf16.mxu0 0
        %556 = vmatpush1.bf16.msra.mxu0 %v534
        %557 = vmatprep.subr.bf16.mxu0 0
        %558 = vmatpush1.bf16.msra.mxu0 %v535
        %559 = vmatprep.subr.bf16.mxu0 0
        %560 = vmatpush1.bf16.msra.mxu0 %v536
        %561 = vmatprep.subr.bf16.mxu0 0
        %562 = vmatpush1.bf16.msra.mxu0 0
        %563 = vmatprep.subr.bf16.mxu0 0
        %564 = vmatpush1.bf16.msra.mxu0 0
        %565 = vmatprep.subr.bf16.mxu0 0
        %566 = vmatpush1.bf16.msra.mxu0 0
        %567 = vmatprep.subr.bf16.mxu0 0
        %568 = vmatpush1.bf16.msra.mxu0 0
        %569 = vmatprep.subr.bf16.mxu0 0
        %570 = vmatpush1.bf16.msra.mxu0 0
        %571 = vmatprep.subr.bf16.mxu0 0
        %572 = vmatpush1.bf16.msra.mxu0 0
        %573 = vmatprep.subr.bf16.mxu0 0
        %574 = vmatpush1.bf16.msra.mxu0 0
        %575 = vmatprep.subr.bf16.mxu0 0
        %576 = vmatpush1.bf16.msra.mxu0 0
        %577 = vmatprep.mubr.bf16.mxu0 0
        %578 = vmatmul.mubr.bf16.gmra.mrb[0].mxu0 %v466
        %v579 = vpop.f32.mrb[0].mxu0
        %v580 = vadd.f32 %v495, %v579
        %v581 = vpop.f32.mrb[0].mxu0
        %v582 = vpop.f32.mrb[0].mxu0
        %v583 = vadd.f32 %v495, %v582
        %v584 = vpop.f32.mrb[0].mxu0
        %585 = vmatprep.mubr.bf16.mxu0 0
        %586 = vmatmul.mubr.bf16.gmra.mrb[0].mxu0 %v467
        %v587 = vpop.f32.mrb[0].mxu0
        %v588 = vadd.f32 %v495, %v587
        %v589 = vpop.f32.mrb[0].mxu0
        %v590 = vpop.f32.mrb[0].mxu0
        %v591 = vadd.f32 %v495, %v590
        %v592 = vpop.f32.mrb[0].mxu0
        %593 = vmatprep.mubr.bf16.mxu0 0
        %594 = vmatmul.mubr.bf16.gmra.mrb[0].mxu0 %v468
        %v595 = vpop.f32.mrb[0].mxu0
        %v596 = vadd.f32 %v495, %v595
        %v597 = vpop.f32.mrb[0].mxu0
        %v598 = vpop.f32.mrb[0].mxu0
        %v599 = vadd.f32 %v495, %v598
        %v600 = vpop.f32.mrb[0].mxu0
        %601 = vmatprep.mubr.bf16.mxu0 0
        %602 = vmatmul.mubr.bf16.gmra.mrb[0].mxu0 %v469
        %v603 = vpop.f32.mrb[0].mxu0
        %v604 = vadd.f32 %v495, %v603
        %v605 = vpop.f32.mrb[0].mxu0
        %v606 = vpop.f32.mrb[0].mxu0
        %v607 = vadd.f32 %v495, %v606
        %v608 = vpop.f32.mrb[0].mxu0
        %609 = vmatprep.mubr.bf16.mxu0 0
        %610 = vmatmul.mubr.bf16.gmra.mrb[0].mxu0 %v470
        %v611 = vpop.f32.mrb[0].mxu0
        %v612 = vadd.f32 %v495, %v611
        %v613 = vpop.f32.mrb[0].mxu0
        %v614 = vpop.f32.mrb[0].mxu0
        %v615 = vadd.f32 %v495, %v614
        %v616 = vpop.f32.mrb[0].mxu0
        %617 = vmatprep.mubr.bf16.mxu0 0
        %618 = vmatmul.mubr.bf16.gmra.mrb[0].mxu0 %v471
        %v619 = vpop.f32.mrb[0].mxu0
        %v620 = vadd.f32 %v495, %v619
        %v621 = vpop.f32.mrb[0].mxu0
        %v622 = vpop.f32.mrb[0].mxu0
        %v623 = vadd.f32 %v495, %v622
        %v624 = vpop.f32.mrb[0].mxu0
        %625 = vmatprep.mubr.bf16.mxu0 0
        %626 = vmatmul.mubr.bf16.gmra.mrb[0].mxu0 %v472
        %v627 = vpop.f32.mrb[0].mxu0
        %v628 = vadd.f32 %v495, %v627
        %v629 = vpop.f32.mrb[0].mxu0
        %v630 = vpop.f32.mrb[0].mxu0
        %v631 = vadd.f32 %v495, %v630
        %v632 = vpop.f32.mrb[0].mxu0
        %633 = vmatprep.mubr.bf16.mxu0 0
        %634 = vmatmul.mubr.bf16.gmra.mrb[0].mxu0 %v473
        %v635 = vpop.f32.mrb[0].mxu0
        %v636 = vadd.f32 %v495, %v635
        %v637 = vpop.f32.mrb[0].mxu0
        %v638 = vpop.f32.mrb[0].mxu0
        %v639 = vadd.f32 %v495, %v638
        %v640 = vpop.f32.mrb[0].mxu0
        %641 = vdwg.mxu0
        %v642 = vmax.f32 %v580, 0.0
        %v643 = vmax.f32 %v583, 0.0
        %v644 = vmax.f32 %v588, 0.0
        %v645 = vmax.f32 %v591, 0.0
        %v646 = vmax.f32 %v596, 0.0
        %v647 = vmax.f32 %v599, 0.0
        %v648 = vmax.f32 %v604, 0.0
        %v649 = vmax.f32 %v607, 0.0
        %v650 = vmax.f32 %v612, 0.0
        %v651 = vmax.f32 %v615, 0.0
        %v652 = vmax.f32 %v620, 0.0
        %v653 = vmax.f32 %v623, 0.0
        %v654 = vmax.f32 %v628, 0.0
        %v655 = vmax.f32 %v631, 0.0
        %v656 = vmax.f32 %v636, 0.0
        %v657 = vmax.f32 %v639, 0.0
        %v658 = vpack.c.bf16 %v643, %v642
        %v659 = vpack.c.bf16 %v645, %v644
        %v660 = vpack.c.bf16 %v647, %v646
        %v661 = vpack.c.bf16 %v649, %v648
        %v662 = vpack.c.bf16 %v651, %v650
        %v663 = vpack.c.bf16 %v653, %v652
        %v664 = vpack.c.bf16 %v655, %v654
        %v665 = vpack.c.bf16 %v657, %v656
        %s666 = scalar_lea.vmem %s3, 64
        %v667 = vld [vmem:[%s666] sm:$0xf]
        %v668 = vld [vmem:[%s666 + $0x4] sm:$0xf]
        %v669 = vld [vmem:[%s666 + $0x8] sm:$0xf]
        %v670 = vld [vmem:[%s666 + $0xc] sm:$0xf]
        %v671 = vld [vmem:[%s666 + $0x10] sm:$0xf]
        %v672 = vld [vmem:[%s666 + $0x14] sm:$0xf]
        %v673 = vld [vmem:[%s666 + $0x18] sm:$0xf]
        %v674 = vld [vmem:[%s666 + $0x1c] sm:$0xf]
        %v675 = vld [vmem:[%s666 + $0x20] sm:$0xf]
        %v676 = vld [vmem:[%s666 + $0x24] sm:$0xf]
        %v677 = vld [vmem:[%s666 + $0x28] sm:$0xf]
        %v678 = vld [vmem:[%s666 + $0x2c] sm:$0xf]
        %v679 = vld [vmem:[%s666 + $0x30] sm:$0xf]
        %v680 = vld [vmem:[%s666 + $0x34] sm:$0xf]
        %v681 = vld [vmem:[%s666 + $0x38] sm:$0xf]
        %v682 = vld [vmem:[%s666 + $0x3c] sm:$0xf]
        %s683 = scalar_lea.vmem %s4, 1
        %v684 = vld [vmem:[%s683] sm:$0x1]
        %v686 = vlaneseq
        %v687 = vshrl.u32 %v686, 7
        %v688 = vsub.s32 0, %v687
        %v689 = vrot.slane %v684, %v688
        %v707 = vunpack.c.l.b16 %v667
        %v708 = vunpack.c.l.b16 %v668
        %v709 = vunpack.c.l.b16 %v669
        %v710 = vunpack.c.l.b16 %v670
        %v711 = vunpack.c.l.b16 %v671
        %v712 = vunpack.c.l.b16 %v672
        %v713 = vunpack.c.l.b16 %v673
        %v714 = vunpack.c.l.b16 %v674
        %v715 = vunpack.c.l.b16 %v675
        %v716 = vunpack.c.l.b16 %v676
        %v717 = vunpack.c.l.b16 %v677
        %v718 = vunpack.c.l.b16 %v678
        %v719 = vunpack.c.l.b16 %v679
        %v720 = vunpack.c.l.b16 %v680
        %v721 = vunpack.c.l.b16 %v681
        %v722 = vunpack.c.l.b16 %v682
        %v723 = vpack.c.b16 %v708, %v707
        %v724 = vpack.c.b16 %v710, %v709
        %v725 = vpack.c.b16 %v712, %v711
        %v726 = vpack.c.b16 %v714, %v713
        %v727 = vpack.c.b16 %v716, %v715
        %v728 = vpack.c.b16 %v718, %v717
        %v729 = vpack.c.b16 %v720, %v719
        %v730 = vpack.c.b16 %v722, %v721
        %739 = vmatprep.subr.bf16.mxu0 0
        %740 = vmatpush1.bf16.msra.mxu0 %v723
        %741 = vmatprep.subr.bf16.mxu0 0
        %742 = vmatpush1.bf16.msra.mxu0 %v724
        %743 = vmatprep.subr.bf16.mxu0 0
        %744 = vmatpush1.bf16.msra.mxu0 %v725
        %745 = vmatprep.subr.bf16.mxu0 0
        %746 = vmatpush1.bf16.msra.mxu0 %v726
        %747 = vmatprep.subr.bf16.mxu0 0
        %748 = vmatpush1.bf16.msra.mxu0 %v727
        %749 = vmatprep.subr.bf16.mxu0 0
        %750 = vmatpush1.bf16.msra.mxu0 %v728
        %751 = vmatprep.subr.bf16.mxu0 0
        %752 = vmatpush1.bf16.msra.mxu0 %v729
        %753 = vmatprep.subr.bf16.mxu0 0
        %754 = vmatpush1.bf16.msra.mxu0 %v730
        %755 = vmatprep.subr.bf16.mxu0 0
        %756 = vmatpush1.bf16.msra.mxu0 0
        %757 = vmatprep.subr.bf16.mxu0 0
        %758 = vmatpush1.bf16.msra.mxu0 0
        %759 = vmatprep.subr.bf16.mxu0 0
        %760 = vmatpush1.bf16.msra.mxu0 0
        %761 = vmatprep.subr.bf16.mxu0 0
        %762 = vmatpush1.bf16.msra.mxu0 0
        %763 = vmatprep.subr.bf16.mxu0 0
        %764 = vmatpush1.bf16.msra.mxu0 0
        %765 = vmatprep.subr.bf16.mxu0 0
        %766 = vmatpush1.bf16.msra.mxu0 0
        %767 = vmatprep.subr.bf16.mxu0 0
        %768 = vmatpush1.bf16.msra.mxu0 0
        %769 = vmatprep.subr.bf16.mxu0 0
        %770 = vmatpush1.bf16.msra.mxu0 0
        %771 = vmatprep.mubr.bf16.mxu0 0
        %772 = vmatmul.mubr.bf16.gmra.mrb[0].mxu0 %v658
        %v773 = vpop.f32.mrb[0].mxu0
        %v774 = vadd.f32 %v689, %v773
        %v775 = vpop.f32.mrb[0].mxu0
        %v776 = vpop.f32.mrb[0].mxu0
        %v777 = vadd.f32 %v689, %v776
        %v778 = vpop.f32.mrb[0].mxu0
        %779 = vmatprep.mubr.bf16.mxu0 0
        %780 = vmatmul.mubr.bf16.gmra.mrb[0].mxu0 %v659
        %v781 = vpop.f32.mrb[0].mxu0
        %v782 = vadd.f32 %v689, %v781
        %v783 = vpop.f32.mrb[0].mxu0
        %v784 = vpop.f32.mrb[0].mxu0
        %v785 = vadd.f32 %v689, %v784
        %v786 = vpop.f32.mrb[0].mxu0
        %787 = vmatprep.mubr.bf16.mxu0 0
        %788 = vmatmul.mubr.bf16.gmra.mrb[0].mxu0 %v660
        %v789 = vpop.f32.mrb[0].mxu0
        %v790 = vadd.f32 %v689, %v789
        %v791 = vpop.f32.mrb[0].mxu0
        %v792 = vpop.f32.mrb[0].mxu0
        %v793 = vadd.f32 %v689, %v792
        %v794 = vpop.f32.mrb[0].mxu0
        %795 = vmatprep.mubr.bf16.mxu0 0
        %796 = vmatmul.mubr.bf16.gmra.mrb[0].mxu0 %v661
        %v797 = vpop.f32.mrb[0].mxu0
        %v798 = vadd.f32 %v689, %v797
        %v799 = vpop.f32.mrb[0].mxu0
        %v800 = vpop.f32.mrb[0].mxu0
        %v801 = vadd.f32 %v689, %v800
        %v802 = vpop.f32.mrb[0].mxu0
        %803 = vmatprep.mubr.bf16.mxu0 0
        %804 = vmatmul.mubr.bf16.gmra.mrb[0].mxu0 %v662
        %v805 = vpop.f32.mrb[0].mxu0
        %v806 = vadd.f32 %v689, %v805
        %v807 = vpop.f32.mrb[0].mxu0
        %v808 = vpop.f32.mrb[0].mxu0
        %v809 = vadd.f32 %v689, %v808
        %v810 = vpop.f32.mrb[0].mxu0
        %811 = vmatprep.mubr.bf16.mxu0 0
        %812 = vmatmul.mubr.bf16.gmra.mrb[0].mxu0 %v663
        %v813 = vpop.f32.mrb[0].mxu0
        %v814 = vadd.f32 %v689, %v813
        %v815 = vpop.f32.mrb[0].mxu0
        %v816 = vpop.f32.mrb[0].mxu0
        %v817 = vadd.f32 %v689, %v816
        %v818 = vpop.f32.mrb[0].mxu0
        %819 = vmatprep.mubr.bf16.mxu0 0
        %820 = vmatmul.mubr.bf16.gmra.mrb[0].mxu0 %v664
        %v821 = vpop.f32.mrb[0].mxu0
        %v822 = vadd.f32 %v689, %v821
        %v823 = vpop.f32.mrb[0].mxu0
        %v824 = vpop.f32.mrb[0].mxu0
        %v825 = vadd.f32 %v689, %v824
        %v826 = vpop.f32.mrb[0].mxu0
        %827 = vmatprep.mubr.bf16.mxu0 0
        %828 = vmatmul.mubr.bf16.gmra.mrb[0].mxu0 %v665
        %v829 = vpop.f32.mrb[0].mxu0
        %v830 = vadd.f32 %v689, %v829
        %v831 = vpop.f32.mrb[0].mxu0
        %v832 = vpop.f32.mrb[0].mxu0
        %v833 = vadd.f32 %v689, %v832
        %v834 = vpop.f32.mrb[0].mxu0
        %835 = vdwg.mxu0
        %v836 = vmax.f32 %v774, 0.0
        %v837 = vmax.f32 %v777, 0.0
        %v838 = vmax.f32 %v782, 0.0
        %v839 = vmax.f32 %v785, 0.0
        %v840 = vmax.f32 %v790, 0.0
        %v841 = vmax.f32 %v793, 0.0
        %v842 = vmax.f32 %v798, 0.0
        %v843 = vmax.f32 %v801, 0.0
        %v844 = vmax.f32 %v806, 0.0
        %v845 = vmax.f32 %v809, 0.0
        %v846 = vmax.f32 %v814, 0.0
        %v847 = vmax.f32 %v817, 0.0
        %v848 = vmax.f32 %v822, 0.0
        %v849 = vmax.f32 %v825, 0.0
        %v850 = vmax.f32 %v830, 0.0
        %v851 = vmax.f32 %v833, 0.0
        %v852 = vpack.c.bf16 %v837, %v836
        %v853 = vpack.c.bf16 %v839, %v838
        %v854 = vpack.c.bf16 %v841, %v840
        %v855 = vpack.c.bf16 %v843, %v842
        %v856 = vpack.c.bf16 %v845, %v844
        %v857 = vpack.c.bf16 %v847, %v846
        %v858 = vpack.c.bf16 %v849, %v848
        %v859 = vpack.c.bf16 %v851, %v850
        %v860 = vld [vmem:[%s5] sm:$0xf]
        %v861 = vld [vmem:[%s5 + $0x4] sm:$0xf]
        %v862 = vld [vmem:[%s5 + $0x8] sm:$0xf]
        %v863 = vld [vmem:[%s5 + $0xc] sm:$0xf]
        %v864 = vld [vmem:[%s5 + $0x10] sm:$0xf]
        %v865 = vld [vmem:[%s5 + $0x14] sm:$0xf]
        %v866 = vld [vmem:[%s5 + $0x18] sm:$0xf]
        %v867 = vld [vmem:[%s5 + $0x1c] sm:$0xf]
        %v868 = vld [vmem:[%s5 + $0x20] sm:$0xf]
        %v869 = vld [vmem:[%s5 + $0x24] sm:$0xf]
        %v870 = vld [vmem:[%s5 + $0x28] sm:$0xf]
        %v871 = vld [vmem:[%s5 + $0x2c] sm:$0xf]
        %v872 = vld [vmem:[%s5 + $0x30] sm:$0xf]
        %v873 = vld [vmem:[%s5 + $0x34] sm:$0xf]
        %v874 = vld [vmem:[%s5 + $0x38] sm:$0xf]
        %v875 = vld [vmem:[%s5 + $0x3c] sm:$0xf]
        %v876 = vld [vmem:[%s6] sm:$0x1]
        %v878 = vlaneseq
        %v879 = vshrl.u32 %v878, 7
        %v880 = vsub.s32 0, %v879
        %v881 = vrot.slane %v876, %v880
        %v899 = vunpack.c.l.b16 %v860
        %v900 = vunpack.c.l.b16 %v861
        %v901 = vunpack.c.l.b16 %v862
        %v902 = vunpack.c.l.b16 %v863
        %v903 = vunpack.c.l.b16 %v864
        %v904 = vunpack.c.l.b16 %v865
        %v905 = vunpack.c.l.b16 %v866
        %v906 = vunpack.c.l.b16 %v867
        %v907 = vunpack.c.l.b16 %v868
        %v908 = vunpack.c.l.b16 %v869
        %v909 = vunpack.c.l.b16 %v870
        %v910 = vunpack.c.l.b16 %v871
        %v911 = vunpack.c.l.b16 %v872
        %v912 = vunpack.c.l.b16 %v873
        %v913 = vunpack.c.l.b16 %v874
        %v914 = vunpack.c.l.b16 %v875
        %v915 = vpack.c.b16 %v900, %v899
        %v916 = vpack.c.b16 %v902, %v901
        %v917 = vpack.c.b16 %v904, %v903
        %v918 = vpack.c.b16 %v906, %v905
        %v919 = vpack.c.b16 %v908, %v907
        %v920 = vpack.c.b16 %v910, %v909
        %v921 = vpack.c.b16 %v912, %v911
        %v922 = vpack.c.b16 %v914, %v913
        %931 = vmatprep.subr.bf16.mxu0 0
        %932 = vmatpush1.bf16.msra.mxu0 %v915
        %933 = vmatprep.subr.bf16.mxu0 0
        %934 = vmatpush1.bf16.msra.mxu0 %v916
        %935 = vmatprep.subr.bf16.mxu0 0
        %936 = vmatpush1.bf16.msra.mxu0 %v917
        %937 = vmatprep.subr.bf16.mxu0 0
        %938 = vmatpush1.bf16.msra.mxu0 %v918
        %939 = vmatprep.subr.bf16.mxu0 0
        %940 = vmatpush1.bf16.msra.mxu0 %v919
        %941 = vmatprep.subr.bf16.mxu0 0
        %942 = vmatpush1.bf16.msra.mxu0 %v920
        %943 = vmatprep.subr.bf16.mxu0 0
        %944 = vmatpush1.bf16.msra.mxu0 %v921
        %945 = vmatprep.subr.bf16.mxu0 0
        %946 = vmatpush1.bf16.msra.mxu0 %v922
        %947 = vmatprep.subr.bf16.mxu0 0
        %948 = vmatpush1.bf16.msra.mxu0 0
        %949 = vmatprep.subr.bf16.mxu0 0
        %950 = vmatpush1.bf16.msra.mxu0 0
        %951 = vmatprep.subr.bf16.mxu0 0
        %952 = vmatpush1.bf16.msra.mxu0 0
        %953 = vmatprep.subr.bf16.mxu0 0
        %954 = vmatpush1.bf16.msra.mxu0 0
        %955 = vmatprep.subr.bf16.mxu0 0
        %956 = vmatpush1.bf16.msra.mxu0 0
        %957 = vmatprep.subr.bf16.mxu0 0
        %958 = vmatpush1.bf16.msra.mxu0 0
        %959 = vmatprep.subr.bf16.mxu0 0
        %960 = vmatpush1.bf16.msra.mxu0 0
        %961 = vmatprep.subr.bf16.mxu0 0
        %962 = vmatpush1.bf16.msra.mxu0 0
        %963 = vmatprep.mubr.bf16.mxu0 0
        %964 = vmatmul.mubr.bf16.gmra.mrb[0].mxu0 %v852
        %v965 = vpop.f32.mrb[0].mxu0
        %v966 = vadd.f32 %v881, %v965
        %v967 = vpop.f32.mrb[0].mxu0
        %v968 = vpop.f32.mrb[0].mxu0
        %v969 = vadd.f32 %v881, %v968
        %v970 = vpop.f32.mrb[0].mxu0
        %971 = vmatprep.mubr.bf16.mxu0 0
        %972 = vmatmul.mubr.bf16.gmra.mrb[0].mxu0 %v853
        %v973 = vpop.f32.mrb[0].mxu0
        %v974 = vadd.f32 %v881, %v973
        %v975 = vpop.f32.mrb[0].mxu0
        %v976 = vpop.f32.mrb[0].mxu0
        %v977 = vadd.f32 %v881, %v976
        %v978 = vpop.f32.mrb[0].mxu0
        %979 = vmatprep.mubr.bf16.mxu0 0
        %980 = vmatmul.mubr.bf16.gmra.mrb[0].mxu0 %v854
        %v981 = vpop.f32.mrb[0].mxu0
        %v982 = vadd.f32 %v881, %v981
        %v983 = vpop.f32.mrb[0].mxu0
        %v984 = vpop.f32.mrb[0].mxu0
        %v985 = vadd.f32 %v881, %v984
        %v986 = vpop.f32.mrb[0].mxu0
        %987 = vmatprep.mubr.bf16.mxu0 0
        %988 = vmatmul.mubr.bf16.gmra.mrb[0].mxu0 %v855
        %v989 = vpop.f32.mrb[0].mxu0
        %v990 = vadd.f32 %v881, %v989
        %v991 = vpop.f32.mrb[0].mxu0
        %v992 = vpop.f32.mrb[0].mxu0
        %v993 = vadd.f32 %v881, %v992
        %v994 = vpop.f32.mrb[0].mxu0
        %995 = vmatprep.mubr.bf16.mxu0 0
        %996 = vmatmul.mubr.bf16.gmra.mrb[0].mxu0 %v856
        %v997 = vpop.f32.mrb[0].mxu0
        %v998 = vadd.f32 %v881, %v997
        %v999 = vpop.f32.mrb[0].mxu0
        %v1000 = vpop.f32.mrb[0].mxu0
        %v1001 = vadd.f32 %v881, %v1000
        %v1002 = vpop.f32.mrb[0].mxu0
        %1003 = vmatprep.mubr.bf16.mxu0 0
        %1004 = vmatmul.mubr.bf16.gmra.mrb[0].mxu0 %v857
        %v1005 = vpop.f32.mrb[0].mxu0
        %v1006 = vadd.f32 %v881, %v1005
        %v1007 = vpop.f32.mrb[0].mxu0
        %v1008 = vpop.f32.mrb[0].mxu0
        %v1009 = vadd.f32 %v881, %v1008
        %v1010 = vpop.f32.mrb[0].mxu0
        %1011 = vmatprep.mubr.bf16.mxu0 0
        %1012 = vmatmul.mubr.bf16.gmra.mrb[0].mxu0 %v858
        %v1013 = vpop.f32.mrb[0].mxu0
        %v1014 = vadd.f32 %v881, %v1013
        %v1015 = vpop.f32.mrb[0].mxu0
        %v1016 = vpop.f32.mrb[0].mxu0
        %v1017 = vadd.f32 %v881, %v1016
        %v1018 = vpop.f32.mrb[0].mxu0
        %1019 = vmatprep.mubr.bf16.mxu0 0
        %1020 = vmatmul.mubr.bf16.gmra.mrb[0].mxu0 %v859
        %v1021 = vpop.f32.mrb[0].mxu0
        %v1022 = vadd.f32 %v881, %v1021
        %v1023 = vpop.f32.mrb[0].mxu0
        %v1024 = vpop.f32.mrb[0].mxu0
        %v1025 = vadd.f32 %v881, %v1024
        %v1026 = vpop.f32.mrb[0].mxu0
        %1027 = vdwg.mxu0
        %v1028 = vlaneseq
        %v1029 = vand.u32 %v1028, 127
        %vm1030 = vcmp.lt.s32.totalorder %v1029, 16
        %v1031 = vsel %vm1030, %v966, -inf
        %v1032 = vsel %vm1030, %v969, -inf
        %v1033 = vsel %vm1030, %v974, -inf
        %v1034 = vsel %vm1030, %v977, -inf
        %v1035 = vsel %vm1030, %v982, -inf
        %v1036 = vsel %vm1030, %v985, -inf
        %v1037 = vsel %vm1030, %v990, -inf
        %v1038 = vsel %vm1030, %v993, -inf
        %v1039 = vsel %vm1030, %v998, -inf
        %v1040 = vsel %vm1030, %v1001, -inf
        %v1041 = vsel %vm1030, %v1006, -inf
        %v1042 = vsel %vm1030, %v1009, -inf
        %v1043 = vsel %vm1030, %v1014, -inf
        %v1044 = vsel %vm1030, %v1017, -inf
        %v1045 = vsel %vm1030, %v1022, -inf
        %v1046 = vsel %vm1030, %v1025, -inf
        %1047 = vmax.xlane.f32.xlu0 %v1031
        %v1048 = vpop.xlane.xlu0 %1047
        %1049 = vmax.xlane.f32.xlu0 %v1032
        %v1050 = vpop.xlane.xlu0 %1049
        %1051 = vmax.xlane.f32.xlu0 %v1033
        %v1052 = vpop.xlane.xlu0 %1051
        %1053 = vmax.xlane.f32.xlu0 %v1034
        %v1054 = vpop.xlane.xlu0 %1053
        %1055 = vmax.xlane.f32.xlu0 %v1035
        %v1056 = vpop.xlane.xlu0 %1055
        %1057 = vmax.xlane.f32.xlu0 %v1036
        %v1058 = vpop.xlane.xlu0 %1057
        %1059 = vmax.xlane.f32.xlu0 %v1037
        %v1060 = vpop.xlane.xlu0 %1059
        %1061 = vmax.xlane.f32.xlu0 %v1038
        %v1062 = vpop.xlane.xlu0 %1061
        %1063 = vmax.xlane.f32.xlu0 %v1039
        %v1064 = vpop.xlane.xlu0 %1063
        %1065 = vmax.xlane.f32.xlu0 %v1040
        %v1066 = vpop.xlane.xlu0 %1065
        %1067 = vmax.xlane.f32.xlu0 %v1041
        %v1068 = vpop.xlane.xlu0 %1067
        %1069 = vmax.xlane.f32.xlu0 %v1042
        %v1070 = vpop.xlane.xlu0 %1069
        %1071 = vmax.xlane.f32.xlu0 %v1043
        %v1072 = vpop.xlane.xlu0 %1071
        %1073 = vmax.xlane.f32.xlu0 %v1044
        %v1074 = vpop.xlane.xlu0 %1073
        %1075 = vmax.xlane.f32.xlu0 %v1045
        %v1076 = vpop.xlane.xlu0 %1075
        %1077 = vmax.xlane.f32.xlu0 %v1046
        %v1078 = vpop.xlane.xlu0 %1077
        %v1079 = vsub.f32 %v1031, %v1048
        %v1080 = vsub.f32 %v1032, %v1050
        %v1081 = vsub.f32 %v1033, %v1052
        %v1082 = vsub.f32 %v1034, %v1054
        %v1083 = vsub.f32 %v1035, %v1056
        %v1084 = vsub.f32 %v1036, %v1058
        %v1085 = vsub.f32 %v1037, %v1060
        %v1086 = vsub.f32 %v1038, %v1062
        %v1087 = vsub.f32 %v1039, %v1064
        %v1088 = vsub.f32 %v1040, %v1066
        %v1089 = vsub.f32 %v1041, %v1068
        %v1090 = vsub.f32 %v1042, %v1070
        %v1091 = vsub.f32 %v1043, %v1072
        %v1092 = vsub.f32 %v1044, %v1074
        %v1093 = vsub.f32 %v1045, %v1076
        %v1094 = vsub.f32 %v1046, %v1078
        %v1095 = vmul.f32 %v1079, 1.442695
        %v1096 = vpow.pop %v1095
        %v1097 = vmul.f32 %v1080, 1.442695
        %v1098 = vpow.pop %v1097
        %v1099 = vmul.f32 %v1081, 1.442695
        %v1100 = vpow.pop %v1099
        %v1101 = vmul.f32 %v1082, 1.442695
        %v1102 = vpow.pop %v1101
        %v1103 = vmul.f32 %v1083, 1.442695
        %v1104 = vpow.pop %v1103
        %v1105 = vmul.f32 %v1084, 1.442695
        %v1106 = vpow.pop %v1105
        %v1107 = vmul.f32 %v1085, 1.442695
        %v1108 = vpow.pop %v1107
        %v1109 = vmul.f32 %v1086, 1.442695
        %v1110 = vpow.pop %v1109
        %v1111 = vmul.f32 %v1087, 1.442695
        %v1112 = vpow.pop %v1111
        %v1113 = vmul.f32 %v1088, 1.442695
        %v1114 = vpow.pop %v1113
        %v1115 = vmul.f32 %v1089, 1.442695
        %v1116 = vpow.pop %v1115
        %v1117 = vmul.f32 %v1090, 1.442695
        %v1118 = vpow.pop %v1117
        %v1119 = vmul.f32 %v1091, 1.442695
        %v1120 = vpow.pop %v1119
        %v1121 = vmul.f32 %v1092, 1.442695
        %v1122 = vpow.pop %v1121
        %v1123 = vmul.f32 %v1093, 1.442695
        %v1124 = vpow.pop %v1123
        %v1125 = vmul.f32 %v1094, 1.442695
        %v1126 = vpow.pop %v1125
        %1127 = vadd.xlane.f32.xlu0 %v1096
        %v1128 = vpop.xlane.xlu0 %1127
        %1129 = vadd.xlane.f32.xlu0 %v1098
        %v1130 = vpop.xlane.xlu0 %1129
        %1131 = vadd.xlane.f32.xlu0 %v1100
        %v1132 = vpop.xlane.xlu0 %1131
        %1133 = vadd.xlane.f32.xlu0 %v1102
        %v1134 = vpop.xlane.xlu0 %1133
        %1135 = vadd.xlane.f32.xlu0 %v1104
        %v1136 = vpop.xlane.xlu0 %1135
        %1137 = vadd.xlane.f32.xlu0 %v1106
        %v1138 = vpop.xlane.xlu0 %1137
        %1139 = vadd.xlane.f32.xlu0 %v1108
        %v1140 = vpop.xlane.xlu0 %1139
        %1141 = vadd.xlane.f32.xlu0 %v1110
        %v1142 = vpop.xlane.xlu0 %1141
        %1143 = vadd.xlane.f32.xlu0 %v1112
        %v1144 = vpop.xlane.xlu0 %1143
        %1145 = vadd.xlane.f32.xlu0 %v1114
        %v1146 = vpop.xlane.xlu0 %1145
        %1147 = vadd.xlane.f32.xlu0 %v1116
        %v1148 = vpop.xlane.xlu0 %1147
        %1149 = vadd.xlane.f32.xlu0 %v1118
        %v1150 = vpop.xlane.xlu0 %1149
        %1151 = vadd.xlane.f32.xlu0 %v1120
        %v1152 = vpop.xlane.xlu0 %1151
        %1153 = vadd.xlane.f32.xlu0 %v1122
        %v1154 = vpop.xlane.xlu0 %1153
        %1155 = vadd.xlane.f32.xlu0 %v1124
        %v1156 = vpop.xlane.xlu0 %1155
        %1157 = vadd.xlane.f32.xlu0 %v1126
        %v1158 = vpop.xlane.xlu0 %1157
        %v1159 = vrcp.pop %v1128
        %v1160 = vrcp.pop %v1130
        %v1161 = vrcp.pop %v1132
        %v1162 = vrcp.pop %v1134
        %v1163 = vrcp.pop %v1136
        %v1164 = vrcp.pop %v1138
        %v1165 = vrcp.pop %v1140
        %v1166 = vrcp.pop %v1142
        %v1167 = vrcp.pop %v1144
        %v1168 = vrcp.pop %v1146
        %v1169 = vrcp.pop %v1148
        %v1170 = vrcp.pop %v1150
        %v1171 = vrcp.pop %v1152
        %v1172 = vrcp.pop %v1154
        %v1173 = vrcp.pop %v1156
        %v1174 = vrcp.pop %v1158
        %v1175 = vmul.f32 %v1096, %v1159
        %v1176 = vmul.f32 %v1098, %v1160
        %v1177 = vmul.f32 %v1100, %v1161
        %v1178 = vmul.f32 %v1102, %v1162
        %v1179 = vmul.f32 %v1104, %v1163
        %v1180 = vmul.f32 %v1106, %v1164
        %v1181 = vmul.f32 %v1108, %v1165
        %v1182 = vmul.f32 %v1110, %v1166
        %v1183 = vmul.f32 %v1112, %v1167
        %v1184 = vmul.f32 %v1114, %v1168
        %v1185 = vmul.f32 %v1116, %v1169
        %v1186 = vmul.f32 %v1118, %v1170
        %v1187 = vmul.f32 %v1120, %v1171
        %v1188 = vmul.f32 %v1122, %v1172
        %v1189 = vmul.f32 %v1124, %v1173
        %v1190 = vmul.f32 %v1126, %v1174
        %1191 = vst [vmem:[%s272] sm:$0xff] %v1175
        %1192 = vst [vmem:[%s272 + $0x8] sm:$0xff] %v1176
        %1193 = vst [vmem:[%s272 + $0x10] sm:$0xff] %v1177
        %1194 = vst [vmem:[%s272 + $0x18] sm:$0xff] %v1178
        %1195 = vst [vmem:[%s272 + $0x20] sm:$0xff] %v1179
        %1196 = vst [vmem:[%s272 + $0x28] sm:$0xff] %v1180
        %1197 = vst [vmem:[%s272 + $0x30] sm:$0xff] %v1181
        %1198 = vst [vmem:[%s272 + $0x38] sm:$0xff] %v1182
        %1199 = vst [vmem:[%s272 + $0x40] sm:$0xff] %v1183
        %1200 = vst [vmem:[%s272 + $0x48] sm:$0xff] %v1184
        %1201 = vst [vmem:[%s272 + $0x50] sm:$0xff] %v1185
        %1202 = vst [vmem:[%s272 + $0x58] sm:$0xff] %v1186
        %1203 = vst [vmem:[%s272 + $0x60] sm:$0xff] %v1187
        %1204 = vst [vmem:[%s272 + $0x68] sm:$0xff] %v1188
        %1205 = vst [vmem:[%s272 + $0x70] sm:$0xff] %v1189
        %1206 = vst [vmem:[%s272 + $0x78] sm:$0xff] %v1190
        %s1207 = sand.u32 %s181, 1
        %s1208 = scalar_lea.sflag [#allocation3], %s1207
        %s1209 = sand.u32 %s181, 1
        %s1210 = smul.addr %s1209, 128
        %s1211 = scalar_lea.vmem [#allocation2], %s1210
        // Predicated region
        $region49: #{tpu_custom_call.1} parent=47 // pred_check
          %p1212 = pneg %p191
        $region50: #{tpu_custom_call.1} parent=47 // pred_check_branch
          %1214 = sbr.rel (%p1212) target = $region52
        $region51: #{tpu_custom_call.1} parent=47 // pred_region
          %s1215 = smul.u32 16, %s21
          %s1217 = ssub.s32 2048, 2048
          %1218 = vsyncadd %s1208, %s1217
          %s1219 = smul.addr %s1215, 128
          %s1220 = scalar_lea.hbm %s7, %s1219
          %s1221 = sshll.u32 %s1211, 4
          %s1222 = int_to_ptr.vmem [resolvable:$true] %s1221
          %1227 = dma.vmem_to_hbm [thread:$0]  %s1222, 2048, %s1220, %s1208, 128, 128, 8
        $region52: #{tpu_custom_call.1} parent=47 // pred_fallthru
          _
      $region48: #{tpu_custom_call.1} parent=5 // pred_fallthru
        _
      %p1228 = scmp.le.s32.totalorder 2, %s16
      // Predicated region
      $region53: #{tpu_custom_call.1} parent=5 // pred_check
        %p1229 = pneg %p1228
      $region54: #{tpu_custom_call.1} parent=5 // pred_check_branch
        %1231 = sbr.rel (%p1229) target = $region56
      $region55: #{tpu_custom_call.1} parent=5 // pred_region
        %s1232 = ssub.s32 %s16, 2
        // Predicated region
        $region57: #{tpu_custom_call.1} parent=55 // pred_check
          %p1233 = pneg %p197
        $region58: #{tpu_custom_call.1} parent=55 // pred_check_branch
          %1235 = sbr.rel (%p1233) target = $region60
        $region59: #{tpu_custom_call.1} parent=55 // pred_region
          %s1236 = sand.u32 %s182, 1
          %s1237 = scalar_lea.sflag [#allocation3], %s1236
          %s1238 = sand.u32 %s182, 1
          %s1239 = smul.addr %s1238, 128
          %s1240 = scalar_lea.vmem [#allocation2], %s1239
          %1241 = dma.done %s1237, 2048
        $region60: #{tpu_custom_call.1} parent=55 // pred_fallthru
          _
      $region56: #{tpu_custom_call.1} parent=5 // pred_fallthru
        _
    $region6: #{tpu_custom_call.1} parent=1 // loop_footer
      %s20 = sadd.s32 1, %s16
    $region7: #{tpu_custom_call.1} parent=1 // loop_footer_branch
      %15 = sbr.rel target = $region3
    $region8: #{tpu_custom_call.1} parent=1 // loop_exit
      _
    %1242 = vsyncpa [#allocation3], 1
    %s1243 = scalar_lea.sflag [#allocation3], 1
    %1244 = vsyncpa %s1243, 1

</llo_original>
